<compile_context>
chip_gen: v7x
topology: tpu7x:2x2x1
jax: 0.10.0
libtpu: 0.0.40
codegen_flags: <defaults>
</compile_context>

<pallas_src>
import functools

import jax
import jax.numpy as jnp
from jax.experimental import pallas as pl
from jax.experimental.pallas import tpu as pltpu


def _round_up(x, m):
    return (x + m - 1) // m * m


def _patch_embed_kernel(x_ref, w_ref, b_ref, o_ref):
    """Single-pass fused projection: o = x @ w + b (bf16 operands, f32 acc)."""
    o_ref[...] = (
        jnp.dot(x_ref[...], w_ref[...], preferred_element_type=jnp.float32)
        + b_ref[...]
    ).astype(o_ref.dtype)


_DEFAULT_VMEM_BUDGET = 12 << 20  # fits default scoped VMEM on v5e/v6e/v7x


def _pick_tiling(M, Kp, Ep, out_itemsize):
    """Choose (tm, Mp, vmem_limit_bytes).

    Prefers an M-tile that divides M exactly (no activation padding) while
    leaving at least two grid steps so the "parallel" axis can shard across
    both v7x TensorCores; falls back to minimal padding otherwise.
    """
    # Resident weight + bias.  Their index_map is constant so they are DMA'd
    # once, but the pipeline still allocates two buffers each (hence 2x).
    fixed = 2 * (Kp * Ep * 2) + 2 * (Ep * 4)
    # Double-buffered bf16 activation rows + double-buffered output rows.
    per_row = 2 * (Kp * 2) + 2 * (Ep * out_itemsize)

    budget = _DEFAULT_VMEM_BUDGET
    vmem_limit = None
    if fixed + 8 * per_row > budget:
        # Very large K*E: grow the budget just enough and raise the kernel's
        # scoped-VMEM limit accordingly (stays well inside v7x's 64 MiB).
        budget = fixed + 8 * per_row
        vmem_limit = budget + (4 << 20)
        if vmem_limit > (48 << 20):
            # TODO(synk): tile the embedding dim (2-D grid, streamed weight)
            # for weights that cannot stay resident in VMEM.
            raise ValueError("patch-embed weight too large for resident-VMEM kernel")

    cap = (budget - fixed) // per_row
    cap = max(8, min(1024, (cap // 8) * 8))

    # 1) Largest divisor of M that is a multiple of 8, fits VMEM and leaves
    #    >= 2 grid steps: no padding, both v7x cores busy.
    best = 0
    d = 8
    while d <= min(cap, M // 2):
        if M % d == 0:
            best = d
        d += 8
    if best:
        return best, M, vmem_limit

    # 2) M fits in a single tile.
    if M <= cap:
        if M >= 128:
            # Worth splitting across two cores; pad a handful of rows (the
            # pad fuses into the patch-extraction producer fusion).
            tm = _round_up(-(-M // 2), 8)
            return tm, 2 * tm, vmem_limit
        return M, M, vmem_limit  # tiny M: single step, block == full dim

    # 3) Fallback: biggest tile that fits, pad M up to a multiple of it.
    tm = cap
    return tm, _round_up(M, tm), vmem_limit


def _matmul_bias(x, w, b, *, tm, out_dtype, vmem_limit_bytes):
    """x: (Mp, Kp) bf16, w: (Kp, Ep) bf16, b: (1, Ep) f32 -> (Mp, Ep)."""
    Mp, Kp = x.shape
    _, Ep = w.shape
    assert Mp % tm == 0

    cost = pl.CostEstimate(
        flops=2 * Mp * Kp * Ep,
        transcendentals=0,
        bytes_accessed=(
            x.size * x.dtype.itemsize
            + w.size * w.dtype.itemsize
            + b.size * b.dtype.itemsize
            + Mp * Ep * jnp.dtype(out_dtype).itemsize
        ),
    )

    return pl.pallas_call(
        _patch_embed_kernel,
        out_shape=jax.ShapeDtypeStruct((Mp, Ep), out_dtype),
        grid_spec=pltpu.PrefetchScalarGridSpec(
            num_scalar_prefetch=0,
            grid=(Mp // tm,),
            in_specs=[
                # Activations: streamed, one (tm, Kp) tile per grid step.
                pl.BlockSpec((tm, Kp), lambda i: (i, 0)),
                # Weight: resident in VMEM, DMA'd once, reused by all M tiles.
                pl.BlockSpec((Kp, Ep), lambda i: (0, 0)),
                # Bias: resident in VMEM.
                pl.BlockSpec((1, Ep), lambda i: (0, 0)),
            ],
            out_specs=pl.BlockSpec((tm, Ep), lambda i: (i, 0)),
        ),
        compiler_params=pltpu.CompilerParams(
            dimension_semantics=("parallel",),
            # Allow XLA to fuse the cast+transpose+pad producer of the
            # activations into this kernel's operand fetch (perf review #1,
            # low-effort variant); weight/bias producers stay as-is.
            allow_input_fusion=[True, False, False],
            vmem_limit_bytes=vmem_limit_bytes,
        ),
        cost_estimate=cost,
    )(x, w, b)


def patch_embeddings_forward(x_nchw, conv_weight, conv_bias, patch_size,
                             out_dtype=jnp.bfloat16):
    """Equivalent to Patch_Embeddings.forward.

    The projection uses bf16 operands with f32 MXU accumulation (~1e-2
    accuracy vs an f32 conv); `out_dtype` therefore defaults to bfloat16 so
    the output writeback is not inflated beyond that precision.  Pass
    out_dtype=jnp.float32 to keep an f32 output buffer.

    Args:
      x_nchw:      (B, C, H, W) image batch (NCHW, like PyTorch).
      conv_weight: (E, C, P, P) conv weight.
      conv_bias:   (E,) conv bias.
      patch_size:  P (kernel size == stride).
      out_dtype:   output dtype (default bfloat16).

    Returns:
      (B, num_patches, E) patch embeddings.
    """
    B, C, H, W = x_nchw.shape
    E = conv_weight.shape[0]
    P = patch_size
    assert H % P == 0 and W % P == 0
    Hp, Wp = H // P, W // P
    num_patches = Hp * Wp
    M = B * num_patches
    K = C * P * P

    # Cast before the patch-extraction transpose (half the bytes if the
    # producer is not fused into the kernel's operand fetch).
    x_bf16 = x_nchw.astype(jnp.bfloat16)

    # Extract non-overlapping patches; flatten each patch in (c, ph, pw) order
    # to match Conv2d's (E, C, P, P) weight layout.
    patches = x_bf16.reshape(B, C, Hp, P, Wp, P)
    patches = jnp.transpose(patches, (0, 2, 4, 1, 3, 5))  # (B, Hp, Wp, C, P, P)
    patches = patches.reshape(M, K)

    w = conv_weight.reshape(E, K).T.astype(jnp.bfloat16)  # (K, E)
    b = conv_bias.astype(jnp.float32).reshape(1, E)       # (1, E)

    # Lane-align both matmul dims: E (lane-dense unmasked output stores) and
    # K (aligned activation loads / clean MXU contraction).  Zero padding is
    # numerically exact.
    Ep = _round_up(max(E, 128), 128)
    Kp = _round_up(max(K, 128), 128)
    if Ep != E:
        w = jnp.pad(w, ((0, 0), (0, Ep - E)))
        b = jnp.pad(b, ((0, 0), (0, Ep - E)))
    if Kp != K:
        w = jnp.pad(w, ((0, Kp - K), (0, 0)))
        patches = jnp.pad(patches, ((0, 0), (0, Kp - K)))

    tm, Mp, vmem_limit = _pick_tiling(M, Kp, Ep, jnp.dtype(out_dtype).itemsize)
    if Mp != M:
        patches = jnp.pad(patches, ((0, Mp - M), (0, 0)))

    out = _matmul_bias(patches, w, b, tm=tm, out_dtype=out_dtype,
                       vmem_limit_bytes=vmem_limit)           # (Mp, Ep)
    out = out[:M, :E]
    return out.reshape(B, num_patches, E)


def _reference_forward(x_nchw, conv_weight, conv_bias, patch_size):
    """Pure-JAX f32 reference (conv via lax.conv_general_dilated)."""
    out = jax.lax.conv_general_dilated(
        x_nchw, conv_weight,
        window_strides=(patch_size, patch_size),
        padding="VALID",
        dimension_numbers=("NCHW", "OIHW", "NCHW"),
    ) + conv_bias[None, :, None, None]
    B, E, Hp, Wp = out.shape
    return jnp.transpose(out.reshape(B, E, Hp * Wp), (0, 2, 1))


if __name__ == "__main__":
    # Small shapes consistent with the module: batch=2, in_channels=4,
    # image 16x16, patch_size=8 -> num_patches=4, embedding_dim=32.
    B, C, H, W = 2, 4, 16, 16
    P = 8
    E = 32

    key = jax.random.PRNGKey(0)
    kx, kw, kb = jax.random.split(key, 3)

    x = jax.random.normal(kx, (B, C, H, W), dtype=jnp.float32)
    # Deterministic init mimicking nn.Conv2d default (uniform in +-1/sqrt(fan_in)).
    fan_in = C * P * P
    bound = 1.0 / (fan_in ** 0.5)
    conv_weight = jax.random.uniform(
        kw, (E, C, P, P), minval=-bound, maxval=bound, dtype=jnp.float32)
    conv_bias = jax.random.uniform(
        kb, (E,), minval=-bound, maxval=bound, dtype=jnp.float32)

    fwd = jax.jit(functools.partial(patch_embeddings_forward, patch_size=P))
    out = jax.block_until_ready(fwd(x, conv_weight, conv_bias))

    # Sanity check against a pure-JAX f32 reference (bf16-operand tolerance).
    ref = _reference_forward(x, conv_weight, conv_bias, P)
    assert out.shape == (B, (H // P) * (W // P), E), out.shape
    out_f32 = out.astype(jnp.float32)
    max_err = float(jnp.max(jnp.abs(out_f32 - ref)))
    assert jnp.allclose(out_f32, ref, atol=3e-2, rtol=3e-2), f"mismatch: {max_err}"

    print("KERNEL_OK")
</pallas_src>

<mosaic_0001>
module attributes {stable_mosaic.version = 11 : i64} {
  func.func @_patch_embed_kernel(%arg0: i32, %arg1: memref<8x256xbf16, #tpu.memory_space<vmem>>, %arg2: memref<256x128xbf16, #tpu.memory_space<vmem>>, %arg3: memref<1x128xf32, #tpu.memory_space<vmem>>, %arg4: memref<8x128xbf16, #tpu.memory_space<vmem>>) attributes {dimension_semantics = [#tpu.dimension_semantics<parallel>], iteration_bounds = array<i64: 1>, scalar_prefetch = 0 : i64, scratch_operands = 0 : i64, tpu.core_type = #tpu.core_type<tc>, window_params = [{transform_indices = @transform_0, window_bounds = array<i64: 8, 256>}, {pipeline_mode = #tpu.pipeline_mode<synchronous>, transform_indices = @transform_1, window_bounds = array<i64: 256, 128>}, {pipeline_mode = #tpu.pipeline_mode<synchronous>, transform_indices = @transform_2, window_bounds = array<i64: 1, 128>}, {transform_indices = @transform_3, window_bounds = array<i64: 8, 128>}]} {
    %c0 = arith.constant 0 : index
    %c0_0 = arith.constant 0 : index
    %0 = vector.load %arg1[%c0, %c0_0] : memref<8x256xbf16, #tpu.memory_space<vmem>>, vector<8x256xbf16>
    %c0_1 = arith.constant 0 : index
    %c0_2 = arith.constant 0 : index
    %1 = vector.load %arg2[%c0_1, %c0_2] : memref<256x128xbf16, #tpu.memory_space<vmem>>, vector<256x128xbf16>
    %cst = arith.constant dense<0.000000e+00> : vector<8x128xf32>
    %2 = tpu.matmul %0, %1, %cst {dimension_numbers = #tpu.dot_dimension_numbers<[1], [0], [0], [1], [0, 0, 1, 1], [], []>} : vector<8x256xbf16>, vector<256x128xbf16>, vector<8x128xf32> -> vector<8x128xf32>
    %c0_3 = arith.constant 0 : index
    %c0_4 = arith.constant 0 : index
    %3 = vector.load %arg3[%c0_3, %c0_4] : memref<1x128xf32, #tpu.memory_space<vmem>>, vector<1x128xf32>
    %4 = vector.broadcast %3 : vector<1x128xf32> to vector<8x128xf32>
    %5 = arith.addf %2, %4 : vector<8x128xf32>
    %6 = arith.truncf %5 : vector<8x128xf32> to vector<8x128xbf16>
    %c0_5 = arith.constant 0 : index
    %c0_6 = arith.constant 0 : index
    %7 = vector.load %arg4[%c0_5, %c0_6] : memref<8x128xbf16, #tpu.memory_space<vmem>>, vector<8x128xbf16>
    tpu.vector_store %arg4[%c0_5, %c0_6], %6 {strides = array<i32>} : memref<8x128xbf16, #tpu.memory_space<vmem>>, vector<8x128xbf16>,
    return
  }
  func.func @transform_0(%arg0: i32) -> (i32, i32) {
    %c0_i32 = arith.constant 0 : i32
    %c0_i32_0 = arith.constant 0 : i32
    return %arg0, %c0_i32 : i32, i32
  }
  func.func @transform_1(%arg0: i32) -> (i32, i32) {
    %c0_i32 = arith.constant 0 : i32
    %c0_i32_0 = arith.constant 0 : i32
    %c0_i32_1 = arith.constant 0 : i32
    return %c0_i32, %c0_i32_0 : i32, i32
  }
  func.func @transform_2(%arg0: i32) -> (i32, i32) {
    %c0_i32 = arith.constant 0 : i32
    %c0_i32_0 = arith.constant 0 : i32
    %c0_i32_1 = arith.constant 0 : i32
    return %c0_i32, %c0_i32_0 : i32, i32
  }
  func.func @transform_3(%arg0: i32) -> (i32, i32) {
    %c0_i32 = arith.constant 0 : i32
    %c0_i32_0 = arith.constant 0 : i32
    return %arg0, %c0_i32 : i32, i32
  }
}

</mosaic_0001>

<llo_original>
// kernel: patch_embeddings_forward.1
$region0: #{patch_embeddings_forward.1}
  #allocation0 [shape = 'u32[]', space=smem, size = 0x4, offset = 0x4, fixed_abs, tag = 'smem constant byte address 0x4 - core index']
  #allocation1 [shape = 'u32[144,128]{1,0:T(1,128)}', space=vmem, size = 0x12000, scoped, tag = 'internal scratch']
  %s0 = inlined_call_operand.vmem [shape: bf16[8,256], index: 0, kind: input, shape index: {}]
  %s1 = inlined_call_operand.vmem [shape: bf16[256,128], index: 1, kind: input, shape index: {}]
  %s2 = inlined_call_operand.vmem [shape: f32[1,128], index: 2, kind: input, shape index: {}]
  %s3 = inlined_call_operand.hbm [shape: bf16[8,128], index: 3, kind: output, shape index: {}]
  %s4 = sld [smem:[#allocation0]]
  $region22: #{patch_embeddings_forward.1} parent=0
    _
  %s6 = ssub.s32 1, %s4
  %s7 = scalar_select 0, %s6, %s4
  $region1: #{patch_embeddings_forward.1} parent=0
    #allocation2 [shape = 'u8[2048]{0}', space=vmem, size = 0x800, scoped, tag = 'output window, operand 0, single buffered']
    #allocation3 [shape = 's32[1]{0}', space=sflag, size = 0x4, scoped, tag = 'scoped memory for patch_embeddings_forward.1']
    %8 = vsyncpa [#allocation3], 0
    // Predicated region
    $region2: #{patch_embeddings_forward.1} parent=1 // pred_check
      _
    $region3: #{patch_embeddings_forward.1} parent=1 // pred_check_branch
      %10 = sbr.rel (0) target = $region5
    $region4: #{patch_embeddings_forward.1} parent=1 // pred_region
      _
    $region5: #{patch_embeddings_forward.1} parent=1 // pred_fallthru
      _
    // Predicated region
    $region6: #{patch_embeddings_forward.1} parent=1 // pred_check
      _
    $region7: #{patch_embeddings_forward.1} parent=1 // pred_check_branch
      %12 = sbr.rel (0) target = $region9
    $region8: #{patch_embeddings_forward.1} parent=1 // pred_region
      _
    $region9: #{patch_embeddings_forward.1} parent=1 // pred_fallthru
      _
    // Predicated region
    $region10: #{patch_embeddings_forward.1} parent=1 // pred_check
      _
    $region11: #{patch_embeddings_forward.1} parent=1 // pred_check_branch
      %14 = sbr.rel (0) target = $region13
    $region12: #{patch_embeddings_forward.1} parent=1 // pred_region
      _
    $region13: #{patch_embeddings_forward.1} parent=1 // pred_fallthru
      _
    %v16 = vld [vmem:[%s0] sm:$0xff]
    %v17 = vld [vmem:[%s1] sm:$0xf]
    %v18 = vld [vmem:[%s1 + $0x4] sm:$0xf]
    %v19 = vld [vmem:[%s1 + $0x8] sm:$0xf]
    %v20 = vld [vmem:[%s1 + $0xc] sm:$0xf]
    %v21 = vld [vmem:[%s1 + $0x10] sm:$0xf]
    %v22 = vld [vmem:[%s1 + $0x14] sm:$0xf]
    %v23 = vld [vmem:[%s1 + $0x18] sm:$0xf]
    %v24 = vld [vmem:[%s1 + $0x1c] sm:$0xf]
    %v25 = vld [vmem:[%s1 + $0x20] sm:$0xf]
    %v26 = vld [vmem:[%s1 + $0x24] sm:$0xf]
    %v27 = vld [vmem:[%s1 + $0x28] sm:$0xf]
    %v28 = vld [vmem:[%s1 + $0x2c] sm:$0xf]
    %v29 = vld [vmem:[%s1 + $0x30] sm:$0xf]
    %v30 = vld [vmem:[%s1 + $0x34] sm:$0xf]
    %v31 = vld [vmem:[%s1 + $0x38] sm:$0xf]
    %v32 = vld [vmem:[%s1 + $0x3c] sm:$0xf]
    %v33 = vld [vmem:[%s1 + $0x40] sm:$0xf]
    %v34 = vld [vmem:[%s1 + $0x44] sm:$0xf]
    %v35 = vld [vmem:[%s1 + $0x48] sm:$0xf]
    %v36 = vld [vmem:[%s1 + $0x4c] sm:$0xf]
    %v37 = vld [vmem:[%s1 + $0x50] sm:$0xf]
    %v38 = vld [vmem:[%s1 + $0x54] sm:$0xf]
    %v39 = vld [vmem:[%s1 + $0x58] sm:$0xf]
    %v40 = vld [vmem:[%s1 + $0x5c] sm:$0xf]
    %v41 = vld [vmem:[%s1 + $0x60] sm:$0xf]
    %v42 = vld [vmem:[%s1 + $0x64] sm:$0xf]
    %v43 = vld [vmem:[%s1 + $0x68] sm:$0xf]
    %v44 = vld [vmem:[%s1 + $0x6c] sm:$0xf]
    %v45 = vld [vmem:[%s1 + $0x70] sm:$0xf]
    %v46 = vld [vmem:[%s1 + $0x74] sm:$0xf]
    %v47 = vld [vmem:[%s1 + $0x78] sm:$0xf]
    %v48 = vld [vmem:[%s1 + $0x7c] sm:$0xf]
    %v49 = vld [vmem:[%s2] sm:$0x1]
    %v51 = vlaneseq
    %v52 = vshrl.u32 %v51, 7
    %v53 = vsub.s32 0, %v52
    %v54 = vrot.slane %v49, %v53
    %v57 = vunpack.c.l.b16 %v16
    %v58 = vunpack.c.h.b16 %v16
    %v59 = vpack.c.b16 %v57, %v57
    %v60 = vpack.c.b16 %v58, %v58
    %v95 = vunpack.c.l.b16 %v17
    %v96 = vunpack.c.l.b16 %v18
    %v97 = vunpack.c.l.b16 %v19
    %v98 = vunpack.c.l.b16 %v20
    %v99 = vunpack.c.l.b16 %v21
    %v100 = vunpack.c.l.b16 %v22
    %v101 = vunpack.c.l.b16 %v23
    %v102 = vunpack.c.l.b16 %v24
    %v103 = vunpack.c.l.b16 %v25
    %v104 = vunpack.c.l.b16 %v26
    %v105 = vunpack.c.l.b16 %v27
    %v106 = vunpack.c.l.b16 %v28
    %v107 = vunpack.c.l.b16 %v29
    %v108 = vunpack.c.l.b16 %v30
    %v109 = vunpack.c.l.b16 %v31
    %v110 = vunpack.c.l.b16 %v32
    %v111 = vunpack.c.l.b16 %v33
    %v112 = vunpack.c.l.b16 %v34
    %v113 = vunpack.c.l.b16 %v35
    %v114 = vunpack.c.l.b16 %v36
    %v115 = vunpack.c.l.b16 %v37
    %v116 = vunpack.c.l.b16 %v38
    %v117 = vunpack.c.l.b16 %v39
    %v118 = vunpack.c.l.b16 %v40
    %v119 = vunpack.c.l.b16 %v41
    %v120 = vunpack.c.l.b16 %v42
    %v121 = vunpack.c.l.b16 %v43
    %v122 = vunpack.c.l.b16 %v44
    %v123 = vunpack.c.l.b16 %v45
    %v124 = vunpack.c.l.b16 %v46
    %v125 = vunpack.c.l.b16 %v47
    %v126 = vunpack.c.l.b16 %v48
    %v127 = vpack.c.b16 %v96, %v95
    %v128 = vpack.c.b16 %v98, %v97
    %v129 = vpack.c.b16 %v100, %v99
    %v130 = vpack.c.b16 %v102, %v101
    %v131 = vpack.c.b16 %v104, %v103
    %v132 = vpack.c.b16 %v106, %v105
    %v133 = vpack.c.b16 %v108, %v107
    %v134 = vpack.c.b16 %v110, %v109
    %v135 = vpack.c.b16 %v112, %v111
    %v136 = vpack.c.b16 %v114, %v113
    %v137 = vpack.c.b16 %v116, %v115
    %v138 = vpack.c.b16 %v118, %v117
    %v139 = vpack.c.b16 %v120, %v119
    %v140 = vpack.c.b16 %v122, %v121
    %v141 = vpack.c.b16 %v124, %v123
    %v142 = vpack.c.b16 %v126, %v125
    %159 = vmatprep.subr.bf16.mxu0 0
    %160 = vmatpush1.bf16.msra.mxu0 %v127
    %161 = vmatprep.subr.bf16.mxu0 0
    %162 = vmatpush1.bf16.msra.mxu0 %v128
    %163 = vmatprep.subr.bf16.mxu0 0
    %164 = vmatpush1.bf16.msra.mxu0 %v129
    %165 = vmatprep.subr.bf16.mxu0 0
    %166 = vmatpush1.bf16.msra.mxu0 %v130
    %167 = vmatprep.subr.bf16.mxu0 0
    %168 = vmatpush1.bf16.msra.mxu0 %v131
    %169 = vmatprep.subr.bf16.mxu0 0
    %170 = vmatpush1.bf16.msra.mxu0 %v132
    %171 = vmatprep.subr.bf16.mxu0 0
    %172 = vmatpush1.bf16.msra.mxu0 %v133
    %173 = vmatprep.subr.bf16.mxu0 0
    %174 = vmatpush1.bf16.msra.mxu0 %v134
    %175 = vmatprep.subr.bf16.mxu0 0
    %176 = vmatpush1.bf16.msra.mxu0 %v135
    %177 = vmatprep.subr.bf16.mxu0 0
    %178 = vmatpush1.bf16.msra.mxu0 %v136
    %179 = vmatprep.subr.bf16.mxu0 0
    %180 = vmatpush1.bf16.msra.mxu0 %v137
    %181 = vmatprep.subr.bf16.mxu0 0
    %182 = vmatpush1.bf16.msra.mxu0 %v138
    %183 = vmatprep.subr.bf16.mxu0 0
    %184 = vmatpush1.bf16.msra.mxu0 %v139
    %185 = vmatprep.subr.bf16.mxu0 0
    %186 = vmatpush1.bf16.msra.mxu0 %v140
    %187 = vmatprep.subr.bf16.mxu0 0
    %188 = vmatpush1.bf16.msra.mxu0 %v141
    %189 = vmatprep.subr.bf16.mxu0 0
    %190 = vmatpush1.bf16.msra.mxu0 %v142
    %191 = vmatprep.mubr.bf16.mxu0 %v60
    %192 = vmatmul.mubr.bf16.gmra.mrb[0].mxu0 %v59
    %v193 = vpop.f32.mrb[0].mxu0
    %v194 = vadd.f32 %v54, %v193
    %v195 = vpop.f32.mrb[0].mxu0
    %v196 = vpop.f32.mrb[0].mxu0
    %v197 = vpop.f32.mrb[0].mxu0
    %198 = vdwg.mxu0
    %v199 = vpack.c.bf16 %v194, %v194
    %200 = vst [vmem:[#allocation2] sm:$0xf] %v199
    // Predicated region
    $region14: #{patch_embeddings_forward.1} parent=1 // pred_check
      _
    $region15: #{patch_embeddings_forward.1} parent=1 // pred_check_branch
      %202 = sbr.rel (0) target = $region17
    $region16: #{patch_embeddings_forward.1} parent=1 // pred_region
      %s204 = ssub.s32 64, 64
      %205 = vsyncadd [#allocation3], %s204
      %s207 = sshll.u32 [#allocation2], 4
      %s208 = int_to_ptr.vmem [resolvable:$true] %s207
      %210 = dma.vmem_to_hbm [thread:$0]  %s208, 64, %s3, [#allocation3]
    $region17: #{patch_embeddings_forward.1} parent=1 // pred_fallthru
      _
    // Predicated region
    $region18: #{patch_embeddings_forward.1} parent=1 // pred_check
      _
    $region19: #{patch_embeddings_forward.1} parent=1 // pred_check_branch
      %212 = sbr.rel (0) target = $region21
    $region20: #{patch_embeddings_forward.1} parent=1 // pred_region
      %213 = dma.done [#allocation3], 64
    $region21: #{patch_embeddings_forward.1} parent=1 // pred_fallthru
      _
    %214 = vsyncpa [#allocation3], 1

</llo_original>
